<compile_context>
chip_gen: v7x
topology: tpu7x:2x2x1
jax: 0.10.0
libtpu: 0.0.40
codegen_flags: <defaults>
</compile_context>

<pallas_src>
import functools

import jax
import jax.numpy as jnp
from jax import lax
from jax.experimental import pallas as pl
from jax.experimental.pallas import tpu as pltpu


# --------------------------- Kernel 1: fused QKV -----------------------------
def qkv_split_kernel(x_ref, w_ref, q_ref, k_ref, v_ref, *, num_heads, head_size):
    """Fused QKV projection + in-VMEM head split (no HBM relayout afterwards).

    x_ref: (tm, C)      w_ref: (C, 3*NH*H)  (scale-folded, pre-cast, resident)
    q_ref/k_ref/v_ref: (NH, tm, H) blocks of the (B, NH, T, H) outputs.
    """
    x = x_ref[...].astype(w_ref.dtype)                   # single cast (no-op in f32 mode)
    y = jnp.dot(x, w_ref[...], preferred_element_type=jnp.float32)
    y = y.astype(q_ref.dtype)                            # (tm, 3*NH*H) in compute dtype
    D = num_heads * head_size
    for h in range(num_heads):                           # static, unrolled; VMEM-only split
        q_ref[h] = y[:, h * head_size:(h + 1) * head_size]
        k_ref[h] = y[:, D + h * head_size:D + (h + 1) * head_size]
        v_ref[h] = y[:, 2 * D + h * head_size:2 * D + (h + 1) * head_size]


# ------------------- Kernel 2: flash attention + projection ------------------
def mha_flash_kernel(q_ref, k_ref, v_ref, wp_ref, b_ref, o_ref,
                     m_sc, l_sc, acc_sc):
    # q_ref: (NH, tq, H) (already scaled by 1/sqrt(H) via the weights)
    # k_ref/v_ref: (NH, tk, H)   wp_ref: (NH*H, C)   b_ref: (1, C)   o_ref: (tq, C)
    qi = pl.program_id(1)
    ki = pl.program_id(2)
    num_heads, tq, head_dim = q_ref.shape
    tk = k_ref.shape[1]

    @pl.when(ki == 0)
    def _init():
        m_sc[...] = jnp.full_like(m_sc, -jnp.inf)
        l_sc[...] = jnp.zeros_like(l_sc)
        acc_sc[...] = jnp.zeros_like(acc_sc)

    # Skip KV tiles that are entirely in the causal future of this query tile.
    @pl.when(ki * tk <= qi * tq + (tq - 1))
    def _compute():
        q = q_ref[...]                               # no per-step scaling / casting
        k = k_ref[...]
        # (NH, tq, tk): contraction directly on H; no explicit k.T transpose.
        s = jnp.einsum('hqd,hkd->hqk', q, k, preferred_element_type=jnp.float32)

        # Causal mask only on tiles the diagonal crosses; interior tiles skip it.
        def _mask(sv):
            row = qi * tq + lax.broadcasted_iota(jnp.int32, (tq, tk), 0)
            col = ki * tk + lax.broadcasted_iota(jnp.int32, (tq, tk), 1)
            return jnp.where((col <= row)[None, :, :], sv, -jnp.inf)

        s = lax.cond(ki * tk + (tk - 1) > qi * tq, _mask, lambda sv: sv, s)

        m_prev = m_sc[...]
        m_new = jnp.maximum(m_prev, s.max(axis=-1, keepdims=True))
        alpha = jnp.exp(m_prev - m_new)              # safe: ki==0 always has col 0
        p = jnp.exp(s - m_new)
        l_sc[...] = alpha * l_sc[...] + p.sum(axis=-1, keepdims=True)
        pv = jnp.einsum('hqk,hkd->hqd', p.astype(v_ref.dtype), v_ref[...],
                        preferred_element_type=jnp.float32)
        acc_sc[...] = alpha * acc_sc[...] + pv
        m_sc[...] = m_new
        # TODO(synk): attention-weight dropout is identity in eval mode.

    @pl.when(ki == pl.num_programs(2) - 1)
    def _finalize():
        l = l_sc[...]
        inv_l = pl.reciprocal(l, approx=True)        # EUP vrcp slot
        inv_l = inv_l * (2.0 - l * inv_l)            # one Newton step -> ~f32 accuracy
        heads_out = acc_sc[...] * inv_l              # (NH, tq, H) f32
        # Head concat in VMEM, then ONE full-depth (tq, NH*H) @ (NH*H, C) matmul.
        flat = jnp.concatenate([heads_out[h] for h in range(num_heads)], axis=-1)
        proj = jnp.dot(flat.astype(wp_ref.dtype), wp_ref[...],
                       preferred_element_type=jnp.float32)
        # TODO(synk): post-projection dropout is identity in eval mode.
        o_ref[...] = (proj + b_ref[...]).astype(o_ref.dtype)


# ------------------------------- Wrapper --------------------------------------
def _auto_vmem_limit(requested, working_set_bytes):
    """Raise the scoped-VMEM limit only when large tiles actually need it."""
    if requested is not None:
        return requested
    if working_set_bytes > 24 * 1024 * 1024:
        # Headroom over the rough estimate, but stay within v7x's 64 MiB physical VMEM.
        return min(int(working_set_bytes) * 2, 64 * 1024 * 1024)
    return None


def multi_head_attention(x, w_qkv, w_proj_t, b_proj, num_heads, head_size, *,
                         q_tile=128, kv_tile=128, qkv_row_tile=512,
                         compute_dtype=None, vmem_limit_bytes=None):
    """x: (B, T, C); w_qkv: (C, 3*NH*H) columns [Q|K|V] head-major;
    w_proj_t: (NH*H, C); b_proj: (C,).  Returns (B, T, C)."""
    B, T, C = x.shape
    NH, H = num_heads, head_size
    D = NH * H
    assert w_qkv.shape == (C, 3 * D)
    assert w_proj_t.shape == (D, C)
    assert b_proj.shape == (C,)

    cdt = x.dtype if compute_dtype is None else jnp.dtype(compute_dtype)

    tm = min(qkv_row_tile, T)
    tq = min(q_tile, T)
    tk = min(kv_tile, T)
    assert T % tm == 0 and T % tq == 0 and T % tk == 0, \
        "T must be divisible by the chosen tile sizes"
    nq, nk = T // tq, T // tk

    # ---- one-time weight prep (wrapper side, tiny) ----
    # Fold the 1/sqrt(H) attention scale into the Q weight columns and pre-cast
    # everything to the MXU-feed dtype (so the kernels do no per-step casts).
    scale = H ** -0.5
    col_scale = jnp.concatenate([jnp.full((D,), scale, w_qkv.dtype),
                                 jnp.ones((2 * D,), w_qkv.dtype)])
    w_qkv_prep = (w_qkv * col_scale).astype(cdt)
    wp_prep = w_proj_t.astype(cdt)
    bias2d = b_proj.reshape(1, C).astype(jnp.float32)

    cbytes = jnp.dtype(cdt).itemsize
    xbytes = x.dtype.itemsize
    k1_ws = 2 * tm * C * xbytes + C * 3 * D * cbytes + 6 * NH * tm * H * cbytes
    k2_ws = (2 * NH * tq * H + 4 * NH * tk * H + D * C) * cbytes \
        + 2 * tq * C * xbytes + NH * tq * (H + 2) * 4

    # ---------- Kernel 1: fused QKV projection + in-VMEM head split ----------
    qkv_shape = jax.ShapeDtypeStruct((B, NH, T, H), cdt)
    q, k, v = pl.pallas_call(
        functools.partial(qkv_split_kernel, num_heads=NH, head_size=H),
        out_shape=(qkv_shape, qkv_shape, qkv_shape),
        grid_spec=pltpu.PrefetchScalarGridSpec(
            num_scalar_prefetch=0,
            grid=(B, T // tm),
            in_specs=[
                pl.BlockSpec((pl.Squeezed(), tm, C), lambda b, i: (b, i, 0)),
                # Full weight kept resident (one DMA total).
                # TODO(synk): tile the 3*NH*H axis if C*3*NH*H nears the VMEM
                # budget (v7x only has 64 MiB physical VMEM).
                pl.BlockSpec((C, 3 * D), lambda b, i: (0, 0)),
            ],
            out_specs=[
                pl.BlockSpec((pl.Squeezed(), NH, tm, H), lambda b, i: (b, 0, i, 0)),
                pl.BlockSpec((pl.Squeezed(), NH, tm, H), lambda b, i: (b, 0, i, 0)),
                pl.BlockSpec((pl.Squeezed(), NH, tm, H), lambda b, i: (b, 0, i, 0)),
            ],
        ),
        compiler_params=pltpu.CompilerParams(
            dimension_semantics=("parallel", "parallel"),
            vmem_limit_bytes=_auto_vmem_limit(vmem_limit_bytes, k1_ws)),
    )(x, w_qkv_prep)

    # ---------- Kernel 2: flash attention + fused output projection ----------
    def q_map(b, i, j):
        return (b, 0, i, 0)

    def kv_map(b, i, j):
        # Clamp causally-skipped KV tiles to the last valid one: the pipeline
        # dedups consecutive identical block indices, so their DMA is free.
        # (Compute for those steps is still skipped by pl.when; ki == 0 always
        #  runs, so the online-softmax running max is finite before any skip.)
        return (b, 0, jnp.minimum(j, (i * tq + (tq - 1)) // tk), 0)

    out = pl.pallas_call(
        mha_flash_kernel,
        out_shape=jax.ShapeDtypeStruct((B, T, C), x.dtype),
        grid_spec=pltpu.PrefetchScalarGridSpec(
            num_scalar_prefetch=0,
            grid=(B, nq, nk),
            in_specs=[
                pl.BlockSpec((pl.Squeezed(), NH, tq, H), q_map),
                pl.BlockSpec((pl.Squeezed(), NH, tk, H), kv_map),
                pl.BlockSpec((pl.Squeezed(), NH, tk, H), kv_map),
                pl.BlockSpec((D, C), lambda b, i, j: (0, 0)),   # resident proj weight
                pl.BlockSpec((1, C), lambda b, i, j: (0, 0)),
            ],
            out_specs=pl.BlockSpec((pl.Squeezed(), tq, C), lambda b, i, j: (b, i, 0)),
            scratch_shapes=[
                pltpu.VMEM((NH, tq, 1), jnp.float32),   # running max m
                pltpu.VMEM((NH, tq, 1), jnp.float32),   # running sum l
                pltpu.VMEM((NH, tq, H), jnp.float32),   # per-head output accumulator
            ],
        ),
        compiler_params=pltpu.CompilerParams(
            dimension_semantics=("parallel", "parallel", "arbitrary"),
            vmem_limit_bytes=_auto_vmem_limit(vmem_limit_bytes, k2_ws)),
    )(q, k, v, wp_prep, bias2d)
    return out


# ------------------------------ Reference & test ------------------------------
def reference_mha(x, wq_heads, wk_heads, wv_heads, w_proj_pt, b_proj):
    """Pure-JAX reference mirroring the PyTorch forward (eval mode)."""
    T = x.shape[1]
    tril = jnp.tril(jnp.ones((T, T), dtype=bool))
    outs = []
    for wq, wk, wv in zip(wq_heads, wk_heads, wv_heads):
        k = x @ wk
        q = x @ wq
        v = x @ wv
        wei = (q @ jnp.swapaxes(k, -2, -1)) * (k.shape[-1] ** -0.5)
        wei = jnp.where(tril, wei, -jnp.inf)
        wei = jax.nn.softmax(wei, axis=-1)
        outs.append(wei @ v)
    cat = jnp.concatenate(outs, axis=-1)
    return cat @ w_proj_pt.T + b_proj


def _make_params(key, n_embd, num_heads, head_size):
    """nn.Linear-style init: U(-1/sqrt(fan_in), 1/sqrt(fan_in))."""
    keys = jax.random.split(key, 3 * num_heads + 2)
    b0 = 1.0 / (n_embd ** 0.5)
    wq = [jax.random.uniform(keys[3 * h + 0], (n_embd, head_size), jnp.float32, -b0, b0)
          for h in range(num_heads)]
    wk = [jax.random.uniform(keys[3 * h + 1], (n_embd, head_size), jnp.float32, -b0, b0)
          for h in range(num_heads)]
    wv = [jax.random.uniform(keys[3 * h + 2], (n_embd, head_size), jnp.float32, -b0, b0)
          for h in range(num_heads)]
    b1 = 1.0 / ((num_heads * head_size) ** 0.5)
    w_proj_pt = jax.random.uniform(keys[-2], (n_embd, num_heads * head_size),
                                   jnp.float32, -b1, b1)
    b_proj = jax.random.uniform(keys[-1], (n_embd,), jnp.float32, -b1, b1)
    return wq, wk, wv, w_proj_pt, b_proj


def _pack_qkv(wq, wk, wv):
    return jnp.concatenate([jnp.concatenate(wq, axis=1),
                            jnp.concatenate(wk, axis=1),
                            jnp.concatenate(wv, axis=1)], axis=1)   # (C, 3*NH*H)


if __name__ == "__main__":
    key0, key1, key2, key3 = jax.random.split(jax.random.PRNGKey(0), 4)

    # ---- Test 1: module-implied small shapes, f32 path, strict tolerance ----
    batch, block_size, n_embd, num_heads, head_size = 2, 8, 32, 4, 8
    x = jax.random.normal(key0, (batch, block_size, n_embd), dtype=jnp.float32)
    wq, wk, wv, w_proj_pt, b_proj = _make_params(key1, n_embd, num_heads, head_size)
    out = multi_head_attention(x, _pack_qkv(wq, wk, wv), w_proj_pt.T, b_proj,
                               num_heads, head_size)
    out = jax.block_until_ready(out)
    ref = reference_mha(x, wq, wk, wv, w_proj_pt, b_proj)
    assert out.shape == (batch, block_size, n_embd)
    err = float(jnp.max(jnp.abs(out - ref)))
    assert jnp.allclose(out, ref, atol=1e-4, rtol=1e-4), f"f32 mismatch, max err {err}"

    # ---- Test 2: multi-tile causal path + bf16 MXU feed, loose tolerance ----
    batch, block_size, n_embd, num_heads, head_size = 2, 256, 128, 4, 32
    x2 = jax.random.normal(key2, (batch, block_size, n_embd), dtype=jnp.float32)
    wq2, wk2, wv2, w_proj_pt2, b_proj2 = _make_params(key3, n_embd, num_heads, head_size)
    out2 = multi_head_attention(x2, _pack_qkv(wq2, wk2, wv2), w_proj_pt2.T, b_proj2,
                                num_heads, head_size,
                                q_tile=128, kv_tile=128, compute_dtype=jnp.bfloat16)
    out2 = jax.block_until_ready(out2)
    ref2 = reference_mha(x2, wq2, wk2, wv2, w_proj_pt2, b_proj2)
    err2 = float(jnp.max(jnp.abs(out2 - ref2)))
    assert jnp.allclose(out2, ref2, atol=5e-2, rtol=5e-2), f"bf16 mismatch, max err {err2}"

    print("KERNEL_OK")
</pallas_src>

<mosaic_0001>
module attributes {stable_mosaic.version = 11 : i64} {
  func.func @qkv_split_kernel(%arg0: i32, %arg1: i32, %arg2: memref<1x8x32xf32, #tpu.memory_space<vmem>>, %arg3: memref<32x96xf32, #tpu.memory_space<vmem>>, %arg4: memref<1x4x8x8xf32, #tpu.memory_space<vmem>>, %arg5: memref<1x4x8x8xf32, #tpu.memory_space<vmem>>, %arg6: memref<1x4x8x8xf32, #tpu.memory_space<vmem>>) attributes {dimension_semantics = [#tpu.dimension_semantics<parallel>, #tpu.dimension_semantics<parallel>], iteration_bounds = array<i64: 2, 1>, scalar_prefetch = 0 : i64, scratch_operands = 0 : i64, tpu.core_type = #tpu.core_type<tc>, window_params = [{transform_indices = @transform_0, window_bounds = array<i64: 1, 8, 32>}, {pipeline_mode = #tpu.pipeline_mode<synchronous>, transform_indices = @transform_1, window_bounds = array<i64: 32, 96>}, {transform_indices = @transform_2, window_bounds = array<i64: 1, 4, 8, 8>}, {transform_indices = @transform_3, window_bounds = array<i64: 1, 4, 8, 8>}, {transform_indices = @transform_4, window_bounds = array<i64: 1, 4, 8, 8>}]} {
    %c0 = arith.constant 0 : index
    %c0_0 = arith.constant 0 : index
    %c0_1 = arith.constant 0 : index
    %0 = vector.load %arg2[%c0, %c0_0, %c0_1] : memref<1x8x32xf32, #tpu.memory_space<vmem>>, vector<1x8x32xf32>
    %1 = vector.shape_cast %0 : vector<1x8x32xf32> to vector<8x32xf32>
    %c0_2 = arith.constant 0 : index
    %c0_3 = arith.constant 0 : index
    %2 = vector.load %arg3[%c0_2, %c0_3] : memref<32x96xf32, #tpu.memory_space<vmem>>, vector<32x96xf32>
    %cst = arith.constant dense<0.000000e+00> : vector<8x96xf32>
    %3 = tpu.matmul %1, %2, %cst {dimension_numbers = #tpu.dot_dimension_numbers<[1], [0], [0], [1], [0, 0, 1, 1], [], []>} : vector<8x32xf32>, vector<32x96xf32>, vector<8x96xf32> -> vector<8x96xf32>
    %4 = vector.extract_strided_slice %3 {offsets = [0, 0], sizes = [8, 8], strides = [1, 1]} : vector<8x96xf32> to vector<8x8xf32>
    %c0_4 = arith.constant 0 : index
    %c0_5 = arith.constant 0 : index
    %c0_6 = arith.constant 0 : index
    %c0_7 = arith.constant 0 : index
    %5 = vector.load %arg4[%c0_4, %c0_5, %c0_6, %c0_7] : memref<1x4x8x8xf32, #tpu.memory_space<vmem>>, vector<1x1x8x8xf32>
    %6 = vector.shape_cast %5 : vector<1x1x8x8xf32> to vector<8x8xf32>
    %7 = vector.shape_cast %4 : vector<8x8xf32> to vector<1x1x8x8xf32>
    tpu.vector_store %arg4[%c0_4, %c0_5, %c0_6, %c0_7], %7 {strides = array<i32>} : memref<1x4x8x8xf32, #tpu.memory_space<vmem>>, vector<1x1x8x8xf32>,
    %8 = vector.extract_strided_slice %3 {offsets = [0, 32], sizes = [8, 8], strides = [1, 1]} : vector<8x96xf32> to vector<8x8xf32>
    %c0_8 = arith.constant 0 : index
    %c0_9 = arith.constant 0 : index
    %c0_10 = arith.constant 0 : index
    %c0_11 = arith.constant 0 : index
    %9 = vector.load %arg5[%c0_8, %c0_9, %c0_10, %c0_11] : memref<1x4x8x8xf32, #tpu.memory_space<vmem>>, vector<1x1x8x8xf32>
    %10 = vector.shape_cast %9 : vector<1x1x8x8xf32> to vector<8x8xf32>
    %11 = vector.shape_cast %8 : vector<8x8xf32> to vector<1x1x8x8xf32>
    tpu.vector_store %arg5[%c0_8, %c0_9, %c0_10, %c0_11], %11 {strides = array<i32>} : memref<1x4x8x8xf32, #tpu.memory_space<vmem>>, vector<1x1x8x8xf32>,
    %12 = vector.extract_strided_slice %3 {offsets = [0, 64], sizes = [8, 8], strides = [1, 1]} : vector<8x96xf32> to vector<8x8xf32>
    %c0_12 = arith.constant 0 : index
    %c0_13 = arith.constant 0 : index
    %c0_14 = arith.constant 0 : index
    %c0_15 = arith.constant 0 : index
    %13 = vector.load %arg6[%c0_12, %c0_13, %c0_14, %c0_15] : memref<1x4x8x8xf32, #tpu.memory_space<vmem>>, vector<1x1x8x8xf32>
    %14 = vector.shape_cast %13 : vector<1x1x8x8xf32> to vector<8x8xf32>
    %15 = vector.shape_cast %12 : vector<8x8xf32> to vector<1x1x8x8xf32>
    tpu.vector_store %arg6[%c0_12, %c0_13, %c0_14, %c0_15], %15 {strides = array<i32>} : memref<1x4x8x8xf32, #tpu.memory_space<vmem>>, vector<1x1x8x8xf32>,
    %16 = vector.extract_strided_slice %3 {offsets = [0, 8], sizes = [8, 8], strides = [1, 1]} : vector<8x96xf32> to vector<8x8xf32>
    %c0_16 = arith.constant 0 : index
    %c1 = arith.constant 1 : index
    %c0_17 = arith.constant 0 : index
    %c0_18 = arith.constant 0 : index
    %17 = vector.load %arg4[%c0_16, %c1, %c0_17, %c0_18] : memref<1x4x8x8xf32, #tpu.memory_space<vmem>>, vector<1x1x8x8xf32>
    %18 = vector.shape_cast %17 : vector<1x1x8x8xf32> to vector<8x8xf32>
    %19 = vector.shape_cast %16 : vector<8x8xf32> to vector<1x1x8x8xf32>
    tpu.vector_store %arg4[%c0_16, %c1, %c0_17, %c0_18], %19 {strides = array<i32>} : memref<1x4x8x8xf32, #tpu.memory_space<vmem>>, vector<1x1x8x8xf32>,
    %20 = vector.extract_strided_slice %3 {offsets = [0, 40], sizes = [8, 8], strides = [1, 1]} : vector<8x96xf32> to vector<8x8xf32>
    %c0_19 = arith.constant 0 : index
    %c1_20 = arith.constant 1 : index
    %c0_21 = arith.constant 0 : index
    %c0_22 = arith.constant 0 : index
    %21 = vector.load %arg5[%c0_19, %c1_20, %c0_21, %c0_22] : memref<1x4x8x8xf32, #tpu.memory_space<vmem>>, vector<1x1x8x8xf32>
    %22 = vector.shape_cast %21 : vector<1x1x8x8xf32> to vector<8x8xf32>
    %23 = vector.shape_cast %20 : vector<8x8xf32> to vector<1x1x8x8xf32>
    tpu.vector_store %arg5[%c0_19, %c1_20, %c0_21, %c0_22], %23 {strides = array<i32>} : memref<1x4x8x8xf32, #tpu.memory_space<vmem>>, vector<1x1x8x8xf32>,
    %24 = vector.extract_strided_slice %3 {offsets = [0, 72], sizes = [8, 8], strides = [1, 1]} : vector<8x96xf32> to vector<8x8xf32>
    %c0_23 = arith.constant 0 : index
    %c1_24 = arith.constant 1 : index
    %c0_25 = arith.constant 0 : index
    %c0_26 = arith.constant 0 : index
    %25 = vector.load %arg6[%c0_23, %c1_24, %c0_25, %c0_26] : memref<1x4x8x8xf32, #tpu.memory_space<vmem>>, vector<1x1x8x8xf32>
    %26 = vector.shape_cast %25 : vector<1x1x8x8xf32> to vector<8x8xf32>
    %27 = vector.shape_cast %24 : vector<8x8xf32> to vector<1x1x8x8xf32>
    tpu.vector_store %arg6[%c0_23, %c1_24, %c0_25, %c0_26], %27 {strides = array<i32>} : memref<1x4x8x8xf32, #tpu.memory_space<vmem>>, vector<1x1x8x8xf32>,
    %28 = vector.extract_strided_slice %3 {offsets = [0, 16], sizes = [8, 8], strides = [1, 1]} : vector<8x96xf32> to vector<8x8xf32>
    %c0_27 = arith.constant 0 : index
    %c2 = arith.constant 2 : index
    %c0_28 = arith.constant 0 : index
    %c0_29 = arith.constant 0 : index
    %29 = vector.load %arg4[%c0_27, %c2, %c0_28, %c0_29] : memref<1x4x8x8xf32, #tpu.memory_space<vmem>>, vector<1x1x8x8xf32>
    %30 = vector.shape_cast %29 : vector<1x1x8x8xf32> to vector<8x8xf32>
    %31 = vector.shape_cast %28 : vector<8x8xf32> to vector<1x1x8x8xf32>
    tpu.vector_store %arg4[%c0_27, %c2, %c0_28, %c0_29], %31 {strides = array<i32>} : memref<1x4x8x8xf32, #tpu.memory_space<vmem>>, vector<1x1x8x8xf32>,
    %32 = vector.extract_strided_slice %3 {offsets = [0, 48], sizes = [8, 8], strides = [1, 1]} : vector<8x96xf32> to vector<8x8xf32>
    %c0_30 = arith.constant 0 : index
    %c2_31 = arith.constant 2 : index
    %c0_32 = arith.constant 0 : index
    %c0_33 = arith.constant 0 : index
    %33 = vector.load %arg5[%c0_30, %c2_31, %c0_32, %c0_33] : memref<1x4x8x8xf32, #tpu.memory_space<vmem>>, vector<1x1x8x8xf32>
    %34 = vector.shape_cast %33 : vector<1x1x8x8xf32> to vector<8x8xf32>
    %35 = vector.shape_cast %32 : vector<8x8xf32> to vector<1x1x8x8xf32>
    tpu.vector_store %arg5[%c0_30, %c2_31, %c0_32, %c0_33], %35 {strides = array<i32>} : memref<1x4x8x8xf32, #tpu.memory_space<vmem>>, vector<1x1x8x8xf32>,
    %36 = vector.extract_strided_slice %3 {offsets = [0, 80], sizes = [8, 8], strides = [1, 1]} : vector<8x96xf32> to vector<8x8xf32>
    %c0_34 = arith.constant 0 : index
    %c2_35 = arith.constant 2 : index
    %c0_36 = arith.constant 0 : index
    %c0_37 = arith.constant 0 : index
    %37 = vector.load %arg6[%c0_34, %c2_35, %c0_36, %c0_37] : memref<1x4x8x8xf32, #tpu.memory_space<vmem>>, vector<1x1x8x8xf32>
    %38 = vector.shape_cast %37 : vector<1x1x8x8xf32> to vector<8x8xf32>
    %39 = vector.shape_cast %36 : vector<8x8xf32> to vector<1x1x8x8xf32>
    tpu.vector_store %arg6[%c0_34, %c2_35, %c0_36, %c0_37], %39 {strides = array<i32>} : memref<1x4x8x8xf32, #tpu.memory_space<vmem>>, vector<1x1x8x8xf32>,
    %40 = vector.extract_strided_slice %3 {offsets = [0, 24], sizes = [8, 8], strides = [1, 1]} : vector<8x96xf32> to vector<8x8xf32>
    %c0_38 = arith.constant 0 : index
    %c3 = arith.constant 3 : index
    %c0_39 = arith.constant 0 : index
    %c0_40 = arith.constant 0 : index
    %41 = vector.load %arg4[%c0_38, %c3, %c0_39, %c0_40] : memref<1x4x8x8xf32, #tpu.memory_space<vmem>>, vector<1x1x8x8xf32>
    %42 = vector.shape_cast %41 : vector<1x1x8x8xf32> to vector<8x8xf32>
    %43 = vector.shape_cast %40 : vector<8x8xf32> to vector<1x1x8x8xf32>
    tpu.vector_store %arg4[%c0_38, %c3, %c0_39, %c0_40], %43 {strides = array<i32>} : memref<1x4x8x8xf32, #tpu.memory_space<vmem>>, vector<1x1x8x8xf32>,
    %44 = vector.extract_strided_slice %3 {offsets = [0, 56], sizes = [8, 8], strides = [1, 1]} : vector<8x96xf32> to vector<8x8xf32>
    %c0_41 = arith.constant 0 : index
    %c3_42 = arith.constant 3 : index
    %c0_43 = arith.constant 0 : index
    %c0_44 = arith.constant 0 : index
    %45 = vector.load %arg5[%c0_41, %c3_42, %c0_43, %c0_44] : memref<1x4x8x8xf32, #tpu.memory_space<vmem>>, vector<1x1x8x8xf32>
    %46 = vector.shape_cast %45 : vector<1x1x8x8xf32> to vector<8x8xf32>
    %47 = vector.shape_cast %44 : vector<8x8xf32> to vector<1x1x8x8xf32>
    tpu.vector_store %arg5[%c0_41, %c3_42, %c0_43, %c0_44], %47 {strides = array<i32>} : memref<1x4x8x8xf32, #tpu.memory_space<vmem>>, vector<1x1x8x8xf32>,
    %48 = vector.extract_strided_slice %3 {offsets = [0, 88], sizes = [8, 8], strides = [1, 1]} : vector<8x96xf32> to vector<8x8xf32>
    %c0_45 = arith.constant 0 : index
    %c3_46 = arith.constant 3 : index
    %c0_47 = arith.constant 0 : index
    %c0_48 = arith.constant 0 : index
    %49 = vector.load %arg6[%c0_45, %c3_46, %c0_47, %c0_48] : memref<1x4x8x8xf32, #tpu.memory_space<vmem>>, vector<1x1x8x8xf32>
    %50 = vector.shape_cast %49 : vector<1x1x8x8xf32> to vector<8x8xf32>
    %51 = vector.shape_cast %48 : vector<8x8xf32> to vector<1x1x8x8xf32>
    tpu.vector_store %arg6[%c0_45, %c3_46, %c0_47, %c0_48], %51 {strides = array<i32>} : memref<1x4x8x8xf32, #tpu.memory_space<vmem>>, vector<1x1x8x8xf32>,
    return
  }
  func.func @transform_0(%arg0: i32, %arg1: i32) -> (i32, i32, i32) {
    %c0_i32 = arith.constant 0 : i32
    %c0_i32_0 = arith.constant 0 : i32
    return %arg0, %arg1, %c0_i32 : i32, i32, i32
  }
  func.func @transform_1(%arg0: i32, %arg1: i32) -> (i32, i32) {
    %c0_i32 = arith.constant 0 : i32
    %c0_i32_0 = arith.constant 0 : i32
    %c0_i32_1 = arith.constant 0 : i32
    return %c0_i32, %c0_i32_0 : i32, i32
  }
  func.func @transform_2(%arg0: i32, %arg1: i32) -> (i32, i32, i32, i32) {
    %c0_i32 = arith.constant 0 : i32
    %c0_i32_0 = arith.constant 0 : i32
    %c0_i32_1 = arith.constant 0 : i32
    return %arg0, %c0_i32, %arg1, %c0_i32_0 : i32, i32, i32, i32
  }
  func.func @transform_3(%arg0: i32, %arg1: i32) -> (i32, i32, i32, i32) {
    %c0_i32 = arith.constant 0 : i32
    %c0_i32_0 = arith.constant 0 : i32
    %c0_i32_1 = arith.constant 0 : i32
    return %arg0, %c0_i32, %arg1, %c0_i32_0 : i32, i32, i32, i32
  }
  func.func @transform_4(%arg0: i32, %arg1: i32) -> (i32, i32, i32, i32) {
    %c0_i32 = arith.constant 0 : i32
    %c0_i32_0 = arith.constant 0 : i32
    %c0_i32_1 = arith.constant 0 : i32
    return %arg0, %c0_i32, %arg1, %c0_i32_0 : i32, i32, i32, i32
  }
}

</mosaic_0001>

<llo_original>
// kernel: tpu_custom_call.1
$region0: #{tpu_custom_call.1}
  #allocation0 [shape = 'u32[]', space=smem, size = 0x4, offset = 0x4, fixed_abs, tag = 'smem constant byte address 0x4 - core index']
  #allocation1 [shape = 'u32[144,128]{1,0:T(1,128)}', space=vmem, size = 0x12000, scoped, tag = 'internal scratch']
  %s0 = inlined_call_operand.hbm [shape: f32[2,8,32], index: 0, kind: input, shape index: {}]
  %s1 = inlined_call_operand.hbm [shape: f32[32,96], index: 1, kind: input, shape index: {}]
  %s2 = inlined_call_operand.hbm [shape: f32[2,4,8,8], index: 2, kind: output, shape index: {0}]
  %s3 = inlined_call_operand.hbm [shape: f32[2,4,8,8], index: 3, kind: output, shape index: {1}]
  %s4 = inlined_call_operand.hbm [shape: f32[2,4,8,8], index: 4, kind: output, shape index: {2}]
  %5 = xla_tuple %s2, %s3, %s4
  %s6 = sld [smem:[#allocation0]]
  $region65: #{tpu_custom_call.1} parent=0
    _
  %s8 = ssub.s32 1, %s6
  %s9 = scalar_select 0, %s8, %s6
  $region1: #{tpu_custom_call.1} parent=0
    #allocation2 [shape = 'u8[8192]{0}', space=vmem, size = 0x2000, scoped, tag = 'input window, operand 0']
    #allocation3 [shape = 's32[2]{0}', space=sflag, size = 0x8, scoped, tag = 'scoped memory for tpu_custom_call.1']
    #allocation4 [shape = 's32[2]{0}', space=sflag, size = 0x8, scoped, tag = 'scoped memory for tpu_custom_call.1']
    #allocation5 [shape = 'u8[16384]{0}', space=vmem, size = 0x4000, scoped, tag = 'input window, operand 1, single buffered']
    #allocation6 [shape = 's32[1]{0}', space=sflag, size = 0x4, scoped, tag = 'scoped memory for tpu_custom_call.1']
    #allocation7 [shape = 'u8[32768]{0}', space=vmem, size = 0x8000, scoped, tag = 'output window, operand 0']
    #allocation8 [shape = 'u8[32768]{0}', space=vmem, size = 0x8000, scoped, tag = 'output window, operand 1']
    #allocation9 [shape = 's32[2]{0}', space=sflag, size = 0x8, scoped, tag = 'scoped memory for tpu_custom_call.1']
    #allocation10 [shape = 'u8[32768]{0}', space=vmem, size = 0x8000, scoped, tag = 'output window, operand 2']
    %10 = vsyncpa [#allocation3], 0
    %s11 = scalar_lea.sflag [#allocation3], 1
    %12 = vsyncpa %s11, 0
    %13 = vsyncpa [#allocation6], 0
    %14 = vsyncpa [#allocation4], 0
    %s15 = scalar_lea.sflag [#allocation4], 1
    %16 = vsyncpa %s15, 0
    %17 = vsyncpa [#allocation9], 0
    %s18 = scalar_lea.sflag [#allocation9], 1
    %19 = vsyncpa %s18, 0
    loop: start=0, step=1, limit=4
    $region2: #{tpu_custom_call.1} parent=1 // loop_pre_header
      _
    $region3: #{tpu_custom_call.1} parent=1 // loop_header
      %s21 = sphi 0, %s25
      %p22 = scmp.ge.s32.totalorder %s21, 4
      %s28 = sphi 0, %s40
      %s29 = sphi 0, %s36
      %s30 = sphi 0, %s28
      %s31 = sphi 0, %s29
      %s32 = sphi 0, %s30
      %s33 = sphi 0, %s31
      %s45 = sphi 0, %s47
      %s48 = sphi 0, %s45
      %s49 = sphi 0, %s48
      %s65 = sphi 0, %s49
      %s69 = sphi 0, %s69
      %s71 = sphi 0, %s69
      %s72 = sphi 0, %s71
      %s86 = sphi 0, %s72
      %s94 = sphi 0, %s96
      %s97 = sphi 0, %s94
      %s98 = sphi 0, %s97
      %s114 = sphi 0, %s98
      %s122 = sphi 0, %s124
      %s125 = sphi 0, %s122
      %s126 = sphi 0, %s125
      %s142 = sphi 0, %s126
      %s150 = sphi 0, %s152
      %s153 = sphi 0, %s150
      %s154 = sphi 0, %s153
      %s170 = sphi 0, %s154
    $region4: #{tpu_custom_call.1} parent=1 // loop_header_branch
      %24 = sbr.rel (%p22) target = $region8
    $region5: #{tpu_custom_call.1} parent=1 // loop_body
      %s26 = ssub.s32 %s21, 1
      %s27 = ssub.s32 %s21, 2
      %s34 = sadd.s32 1, %s29
      %p35 = scmp.ge.s32.totalorder %s34, 1
      %s36 = scalar_select %p35, 0, %s34
      %s37 = sadd.s32 1, %s28
      %s38 = scalar_select %p35, %s37, %s28
      %p39 = scmp.ge.s32.totalorder %s38, 2
      %s40 = scalar_select %p39, 0, %s38
      %s41 = ssub.s32 %s28, %s40
      %s42 = ssub.s32 %s29, %s36
      %s43 = sor.u32 %s41, %s42
      %p44 = scmp.eq.s32.totalorder %s43, 0
      %s46 = sadd.s32 %s45, 1
      %s47 = scalar_select %p44, %s45, %s46
      %p50 = pneg %p44
      %p51 = scmp.eq.s32.totalorder %s21, 1
      %p52 = por %p50, %p51
      %p53 = scmp.ne.s32.totalorder %s45, %s48
      %p54 = scmp.eq.s32.totalorder %s21, 0
      %p55 = por %p53, %p54
      %p56 = scmp.ne.s32.totalorder %s45, %s48
      %p57 = scmp.eq.s32.totalorder %s26, 1
      %p58 = por %p56, %p57
      %p59 = scmp.ne.s32.totalorder %s48, %s49
      %p60 = scmp.eq.s32.totalorder %s26, 0
      %p61 = por %p59, %p60
      %p62 = scmp.ne.s32.totalorder %s48, %s49
      %p63 = scmp.eq.s32.totalorder %s27, 1
      %p64 = por %p62, %p63
      %p66 = scmp.ne.s32.totalorder %s49, %s65
      %p67 = scmp.eq.s32.totalorder %s27, 0
      %p68 = por %p66, %p67
      %s70 = sadd.s32 %s69, 1
      %p73 = scmp.eq.s32.totalorder %s21, 1
      %p74 = scmp.ne.s32.totalorder %s69, %s71
      %p75 = scmp.eq.s32.totalorder %s21, 0
      %p76 = por %p74, %p75
      %p77 = scmp.ne.s32.totalorder %s69, %s71
      %p78 = scmp.eq.s32.totalorder %s26, 1
      %p79 = por %p77, %p78
      %p80 = scmp.ne.s32.totalorder %s71, %s72
      %p81 = scmp.eq.s32.totalorder %s26, 0
      %p82 = por %p80, %p81
      %p83 = scmp.ne.s32.totalorder %s71, %s72
      %p84 = scmp.eq.s32.totalorder %s27, 1
      %p85 = por %p83, %p84
      %p87 = scmp.ne.s32.totalorder %s72, %s86
      %p88 = scmp.eq.s32.totalorder %s27, 0
      %p89 = por %p87, %p88
      %s90 = ssub.s32 %s28, %s40
      %s91 = ssub.s32 %s29, %s36
      %s92 = sor.u32 %s90, %s91
      %p93 = scmp.eq.s32.totalorder %s92, 0
      %s95 = sadd.s32 %s94, 1
      %s96 = scalar_select %p93, %s94, %s95
      %p99 = pneg %p93
      %p100 = scmp.eq.s32.totalorder %s21, 1
      %p101 = por %p99, %p100
      %p102 = scmp.ne.s32.totalorder %s94, %s97
      %p103 = scmp.eq.s32.totalorder %s21, 0
      %p104 = por %p102, %p103
      %p105 = scmp.ne.s32.totalorder %s94, %s97
      %p106 = scmp.eq.s32.totalorder %s26, 1
      %p107 = por %p105, %p106
      %p108 = scmp.ne.s32.totalorder %s97, %s98
      %p109 = scmp.eq.s32.totalorder %s26, 0
      %p110 = por %p108, %p109
      %p111 = scmp.ne.s32.totalorder %s97, %s98
      %p112 = scmp.eq.s32.totalorder %s27, 1
      %p113 = por %p111, %p112
      %p115 = scmp.ne.s32.totalorder %s98, %s114
      %p116 = scmp.eq.s32.totalorder %s27, 0
      %p117 = por %p115, %p116
      %s118 = ssub.s32 %s28, %s40
      %s119 = ssub.s32 %s29, %s36
      %s120 = sor.u32 %s118, %s119
      %p121 = scmp.eq.s32.totalorder %s120, 0
      %s123 = sadd.s32 %s122, 1
      %s124 = scalar_select %p121, %s122, %s123
      %p127 = pneg %p121
      %p128 = scmp.eq.s32.totalorder %s21, 1
      %p129 = por %p127, %p128
      %p130 = scmp.ne.s32.totalorder %s122, %s125
      %p131 = scmp.eq.s32.totalorder %s21, 0
      %p132 = por %p130, %p131
      %p133 = scmp.ne.s32.totalorder %s122, %s125
      %p134 = scmp.eq.s32.totalorder %s26, 1
      %p135 = por %p133, %p134
      %p136 = scmp.ne.s32.totalorder %s125, %s126
      %p137 = scmp.eq.s32.totalorder %s26, 0
      %p138 = por %p136, %p137
      %p139 = scmp.ne.s32.totalorder %s125, %s126
      %p140 = scmp.eq.s32.totalorder %s27, 1
      %p141 = por %p139, %p140
      %p143 = scmp.ne.s32.totalorder %s126, %s142
      %p144 = scmp.eq.s32.totalorder %s27, 0
      %p145 = por %p143, %p144
      %s146 = ssub.s32 %s28, %s40
      %s147 = ssub.s32 %s29, %s36
      %s148 = sor.u32 %s146, %s147
      %p149 = scmp.eq.s32.totalorder %s148, 0
      %s151 = sadd.s32 %s150, 1
      %s152 = scalar_select %p149, %s150, %s151
      %p155 = pneg %p149
      %p156 = scmp.eq.s32.totalorder %s21, 1
      %p157 = por %p155, %p156
      %p158 = scmp.ne.s32.totalorder %s150, %s153
      %p159 = scmp.eq.s32.totalorder %s21, 0
      %p160 = por %p158, %p159
      %p161 = scmp.ne.s32.totalorder %s150, %s153
      %p162 = scmp.eq.s32.totalorder %s26, 1
      %p163 = por %p161, %p162
      %p164 = scmp.ne.s32.totalorder %s153, %s154
      %p165 = scmp.eq.s32.totalorder %s26, 0
      %p166 = por %p164, %p165
      %p167 = scmp.ne.s32.totalorder %s153, %s154
      %p168 = scmp.eq.s32.totalorder %s27, 1
      %p169 = por %p167, %p168
      %p171 = scmp.ne.s32.totalorder %s154, %s170
      %p172 = scmp.eq.s32.totalorder %s27, 0
      %p173 = por %p171, %p172
      %p174 = scmp.le.s32.totalorder 1, %s21
      %p175 = scmp.lt.s32.totalorder %s21, 3
      %p176 = pnand %p174, %p175
      %p177 = pneg %p176
      // Predicated region
      $region9: #{tpu_custom_call.1} parent=5 // pred_check
        _
      $region10: #{tpu_custom_call.1} parent=5 // pred_check_branch
        %179 = sbr.rel (%p176) target = $region12
      $region11: #{tpu_custom_call.1} parent=5 // pred_region
        %s180 = ssub.s32 %s21, 1
        // Predicated region
        $region13: #{tpu_custom_call.1} parent=11 // pred_check
          %p181 = pneg %p82
        $region14: #{tpu_custom_call.1} parent=11 // pred_check_branch
          %183 = sbr.rel (%p181) target = $region16
        $region15: #{tpu_custom_call.1} parent=11 // pred_region
          %s185 = ssub.s32 512, 512
          %186 = vsyncadd [#allocation6], %s185
          %s187 = sshll.u32 [#allocation5], 4
          %s188 = int_to_ptr.vmem [resolvable:$true] %s187
          %193 = dma.hbm_to_vmem [thread:$0]  %s1, 512, %s188, [#allocation6], 128, 128, 8
        $region16: #{tpu_custom_call.1} parent=11 // pred_fallthru
          _
      $region12: #{tpu_custom_call.1} parent=5 // pred_fallthru
        _
      %p194 = scmp.lt.s32.totalorder %s21, 2
      // Predicated region
      $region17: #{tpu_custom_call.1} parent=5 // pred_check
        %p195 = pneg %p194
      $region18: #{tpu_custom_call.1} parent=5 // pred_check_branch
        %197 = sbr.rel (%p195) target = $region20
      $region19: #{tpu_custom_call.1} parent=5 // pred_region
        // Predicated region
        $region21: #{tpu_custom_call.1} parent=19 // pred_check
          %p198 = pneg %p55
        $region22: #{tpu_custom_call.1} parent=19 // pred_check_branch
          %200 = sbr.rel (%p198) target = $region24
        $region23: #{tpu_custom_call.1} parent=19 // pred_region
          %s201 = sand.u32 %s45, 1
          %s202 = scalar_lea.sflag [#allocation3], %s201
          %s203 = sand.u32 %s45, 1
          %s204 = smul.addr %s203, 8
          %s205 = scalar_lea.vmem [#allocation2], %s204
          %s207 = ssub.s32 128, 128
          %208 = vsyncadd %s202, %s207
          %s209 = sadd.s32 %s29, %s28
          %s210 = smul.addr %s209, 128
          %s211 = scalar_lea.hbm %s0, %s210
          %s213 = sshll.u32 %s205, 4
          %s214 = int_to_ptr.vmem [resolvable:$true] %s213
          %216 = dma.hbm_to_vmem [thread:$0]  %s211, 128, %s214, %s202
        $region24: #{tpu_custom_call.1} parent=19 // pred_fallthru
          _
      $region20: #{tpu_custom_call.1} parent=5 // pred_fallthru
        _
      %p217 = scmp.le.s32.totalorder 1, %s21
      %p218 = scmp.lt.s32.totalorder %s21, 3
      %p219 = pnand %p217, %p218
      %p220 = pneg %p219
      // Predicated region
      $region25: #{tpu_custom_call.1} parent=5 // pred_check
        _
      $region26: #{tpu_custom_call.1} parent=5 // pred_check_branch
        %222 = sbr.rel (%p219) target = $region28
      $region27: #{tpu_custom_call.1} parent=5 // pred_region
        %s223 = ssub.s32 %s21, 1
        %s224 = sand.u32 %s48, 1
        %s225 = scalar_lea.sflag [#allocation3], %s224
        %s226 = sand.u32 %s48, 1
        %s227 = smul.addr %s226, 8
        %s228 = scalar_lea.vmem [#allocation2], %s227
        // Predicated region
        $region29: #{tpu_custom_call.1} parent=27 // pred_check
          %p229 = pneg %p61
        $region30: #{tpu_custom_call.1} parent=27 // pred_check_branch
          %231 = sbr.rel (%p229) target = $region32
        $region31: #{tpu_custom_call.1} parent=27 // pred_region
          %232 = dma.done %s225, 128
        $region32: #{tpu_custom_call.1} parent=27 // pred_fallthru
          _
        // Predicated region
        $region33: #{tpu_custom_call.1} parent=27 // pred_check
          %p233 = pneg %p82
        $region34: #{tpu_custom_call.1} parent=27 // pred_check_branch
          %235 = sbr.rel (%p233) target = $region36
        $region35: #{tpu_custom_call.1} parent=27 // pred_region
          %236 = dma.done [#allocation6], 512
        $region36: #{tpu_custom_call.1} parent=27 // pred_fallthru
          _
        %s237 = sand.u32 %s48, 1
        %s238 = scalar_lea.sflag [#allocation3], %s237
        %s239 = sand.u32 %s48, 1
        %s240 = smul.addr %s239, 8
        %s241 = scalar_lea.vmem [#allocation2], %s240
        %p242 = pneg %p61
        %p243 = pneg %p58
        %p244 = pneg %p82
        %p245 = pneg %p79
        %p246 = pneg %p110
        %p247 = pneg %p107
        %s248 = sand.u32 %s97, 1
        %s249 = scalar_lea.sflag [#allocation4], %s248
        %s250 = sand.u32 %s97, 1
        %s251 = smul.addr %s250, 32
        %s252 = scalar_lea.vmem [#allocation7], %s251
        %p253 = pneg %p138
        %p254 = pneg %p135
        %s255 = sand.u32 %s26, 1
        %s256 = scalar_lea.sflag [#allocation9], %s255
        %s257 = sand.u32 %s125, 1
        %s258 = smul.addr %s257, 32
        %s259 = scalar_lea.vmem [#allocation8], %s258
        %p260 = pneg %p166
        %p261 = pneg %p163
        %s262 = sand.u32 %s26, 1
        %s263 = scalar_lea.sflag [#allocation9], %s262
        %s264 = sand.u32 %s153, 1
        %s265 = smul.addr %s264, 32
        %s266 = scalar_lea.vmem [#allocation10], %s265
        %v267 = vld [vmem:[%s228] sm:$0xff]
        %v268 = vld [vmem:[#allocation5] sm:$0xff]
        %v269 = vld [vmem:[#allocation5 + $0x8] sm:$0xff]
        %v270 = vld [vmem:[#allocation5 + $0x10] sm:$0xff]
        %v271 = vld [vmem:[#allocation5 + $0x18] sm:$0xff]
        %vm272 = vcmask 261120
        %v274 = vsel %vm272, %v267, 0
        %276 = vmatprep.subr.mxu0 0.0
        %277 = vmatpush1.msra.mxu0 %v268
        %278 = vmatprep.subr.mxu0 0.0
        %279 = vmatpush1.msra.mxu0 %v269
        %280 = vmatprep.subr.mxu0 0.0
        %281 = vmatpush1.msra.mxu0 %v270
        %282 = vmatprep.subr.mxu0 0.0
        %283 = vmatpush1.msra.mxu0 %v271
        %284 = vmatprep.subr.mxu0 0.0
        %285 = vmatpush1.msra.mxu0 0.0
        %286 = vmatprep.subr.mxu0 0.0
        %287 = vmatpush1.msra.mxu0 0.0
        %288 = vmatprep.subr.mxu0 0.0
        %289 = vmatpush1.msra.mxu0 0.0
        %290 = vmatprep.subr.mxu0 0.0
        %291 = vmatpush1.msra.mxu0 0.0
        %292 = vmatprep.subr.mxu0 0.0
        %293 = vmatpush1.msra.mxu0 0.0
        %294 = vmatprep.subr.mxu0 0.0
        %295 = vmatpush1.msra.mxu0 0.0
        %296 = vmatprep.subr.mxu0 0.0
        %297 = vmatpush1.msra.mxu0 0.0
        %298 = vmatprep.subr.mxu0 0.0
        %299 = vmatpush1.msra.mxu0 0.0
        %300 = vmatprep.subr.mxu0 0.0
        %301 = vmatpush1.msra.mxu0 0.0
        %302 = vmatprep.subr.mxu0 0.0
        %303 = vmatpush1.msra.mxu0 0.0
        %304 = vmatprep.subr.mxu0 0.0
        %305 = vmatpush1.msra.mxu0 0.0
        %306 = vmatprep.subr.mxu0 0.0
        %307 = vmatpush1.msra.mxu0 0.0
        %308 = vmatprep.subr.mxu0 0.0
        %309 = vmatpush1.msra.mxu0 0.0
        %310 = vmatprep.subr.mxu0 0.0
        %311 = vmatpush1.msra.mxu0 0.0
        %312 = vmatprep.subr.mxu0 0.0
        %313 = vmatpush1.msra.mxu0 0.0
        %314 = vmatprep.subr.mxu0 0.0
        %315 = vmatpush1.msra.mxu0 0.0
        %316 = vmatprep.subr.mxu0 0.0
        %317 = vmatpush1.msra.mxu0 0.0
        %318 = vmatprep.subr.mxu0 0.0
        %319 = vmatpush1.msra.mxu0 0.0
        %320 = vmatprep.subr.mxu0 0.0
        %321 = vmatpush1.msra.mxu0 0.0
        %322 = vmatprep.subr.mxu0 0.0
        %323 = vmatpush1.msra.mxu0 0.0
        %324 = vmatprep.subr.mxu0 0.0
        %325 = vmatpush1.msra.mxu0 0.0
        %326 = vmatprep.subr.mxu0 0.0
        %327 = vmatpush1.msra.mxu0 0.0
        %328 = vmatprep.subr.mxu0 0.0
        %329 = vmatpush1.msra.mxu0 0.0
        %330 = vmatprep.subr.mxu0 0.0
        %331 = vmatpush1.msra.mxu0 0.0
        %332 = vmatprep.subr.mxu0 0.0
        %333 = vmatpush1.msra.mxu0 0.0
        %334 = vmatprep.subr.mxu0 0.0
        %335 = vmatpush1.msra.mxu0 0.0
        %336 = vmatprep.subr.mxu0 0.0
        %337 = vmatpush1.msra.mxu0 0.0
        %338 = vmatprep.subr.mxu0 0.0
        %339 = vmatpush1.msra.mxu0 0.0
        %340 = vmatprep.mubr.f32.mxu0 0.0
        %341 = vmatmul.mubr.f32.gmra.mrb[0].mxu0 %v274
        %v342 = vpop.f32.mrb[0].mxu0
        %v343 = vadd.f32 0.0, %v342
        %v344 = vpop.f32.mrb[0].mxu0
        %345 = vdwg.mxu0
        %vm346 = vcmask 64512
        %347 = vst.msk [vmem:[%s252] sm:$0xff] %vm346, %v343
        %349 = vrot.lane.b32.xlu0 %v343, 96
        %v350 = vpop.permute.xlu0 %349
        %352 = vst.msk [vmem:[%s259] sm:$0xff] %vm346, %v350
        %353 = vrot.lane.b32.xlu0 %v343, 64
        %v354 = vpop.permute.xlu0 %353
        %356 = vst.msk [vmem:[%s266] sm:$0xff] %vm346, %v354
        %357 = vrot.lane.b32.xlu0 %v343, 120
        %v358 = vpop.permute.xlu0 %357
        %s360 = scalar_lea.vmem %s252, 8 [#allocation7]
        %361 = vst.msk [vmem:[%s360] sm:$0xff] %vm346, %v358
        %362 = vrot.lane.b32.xlu0 %v343, 88
        %v363 = vpop.permute.xlu0 %362
        %s365 = scalar_lea.vmem %s259, 8 [#allocation8]
        %366 = vst.msk [vmem:[%s365] sm:$0xff] %vm346, %v363
        %367 = vrot.lane.b32.xlu0 %v343, 56
        %v368 = vpop.permute.xlu0 %367
        %s370 = scalar_lea.vmem %s266, 8 [#allocation10]
        %371 = vst.msk [vmem:[%s370] sm:$0xff] %vm346, %v368
        %372 = vrot.lane.b32.xlu0 %v343, 112
        %v373 = vpop.permute.xlu0 %372
        %s375 = scalar_lea.vmem %s252, 16 [#allocation7]
        %376 = vst.msk [vmem:[%s375] sm:$0xff] %vm346, %v373
        %377 = vrot.lane.b32.xlu0 %v343, 80
        %v378 = vpop.permute.xlu0 %377
        %s380 = scalar_lea.vmem %s259, 16 [#allocation8]
        %381 = vst.msk [vmem:[%s380] sm:$0xff] %vm346, %v378
        %382 = vrot.lane.b32.xlu0 %v343, 48
        %v383 = vpop.permute.xlu0 %382
        %s385 = scalar_lea.vmem %s266, 16 [#allocation10]
        %386 = vst.msk [vmem:[%s385] sm:$0xff] %vm346, %v383
        %387 = vrot.lane.b32.xlu0 %v343, 104
        %v388 = vpop.permute.xlu0 %387
        %s390 = scalar_lea.vmem %s252, 24 [#allocation7]
        %391 = vst.msk [vmem:[%s390] sm:$0xff] %vm346, %v388
        %392 = vrot.lane.b32.xlu0 %v343, 72
        %v393 = vpop.permute.xlu0 %392
        %s395 = scalar_lea.vmem %s259, 24 [#allocation8]
        %396 = vst.msk [vmem:[%s395] sm:$0xff] %vm346, %v393
        %397 = vrot.lane.b32.xlu0 %v343, 40
        %v398 = vpop.permute.xlu0 %397
        %s400 = scalar_lea.vmem %s266, 24 [#allocation10]
        %401 = vst.msk [vmem:[%s400] sm:$0xff] %vm346, %v398
        %s402 = sand.u32 %s97, 1
        %s403 = scalar_lea.sflag [#allocation4], %s402
        %s404 = sand.u32 %s97, 1
        %s405 = smul.addr %s404, 32
        %s406 = scalar_lea.vmem [#allocation7], %s405
        %s407 = sand.u32 %s26, 1
        %s408 = scalar_lea.sflag [#allocation9], %s407
        %s409 = sand.u32 %s125, 1
        %s410 = smul.addr %s409, 32
        %s411 = scalar_lea.vmem [#allocation8], %s410
        %s412 = sand.u32 %s26, 1
        %s413 = scalar_lea.sflag [#allocation9], %s412
        %s414 = sand.u32 %s153, 1
        %s415 = smul.addr %s414, 32
        %s416 = scalar_lea.vmem [#allocation10], %s415
        // Predicated region
        $region37: #{tpu_custom_call.1} parent=27 // pred_check
          %p417 = pneg %p107
        $region38: #{tpu_custom_call.1} parent=27 // pred_check_branch
          %419 = sbr.rel (%p417) target = $region40
        $region39: #{tpu_custom_call.1} parent=27 // pred_region
          %s421 = ssub.s32 512, 512
          %422 = vsyncadd %s403, %s421
          %s423 = smul.addr %s30, 4
          %s424 = sadd.s32 %s31, %s423
          %s425 = smul.addr %s424, 128
          %s426 = scalar_lea.hbm %s2, %s425
          %s427 = sshll.u32 %s406, 4
          %s428 = int_to_ptr.vmem [resolvable:$true] %s427
          %433 = dma.vmem_to_hbm [thread:$0]  %s428, 512, %s426, %s403, 128, 128, 8
        $region40: #{tpu_custom_call.1} parent=27 // pred_fallthru
          _
        // Predicated region
        $region41: #{tpu_custom_call.1} parent=27 // pred_check
          %p434 = pneg %p135
        $region42: #{tpu_custom_call.1} parent=27 // pred_check_branch
          %436 = sbr.rel (%p434) target = $region44
        $region43: #{tpu_custom_call.1} parent=27 // pred_region
          %s438 = ssub.s32 512, 512
          %439 = vsyncadd %s408, %s438
          %s440 = smul.addr %s30, 4
          %s441 = sadd.s32 %s31, %s440
          %s442 = smul.addr %s441, 128
          %s443 = scalar_lea.hbm %s3, %s442
          %s444 = sshll.u32 %s411, 4
          %s445 = int_to_ptr.vmem [resolvable:$true] %s444
          %450 = dma.vmem_to_hbm [thread:$0]  %s445, 512, %s443, %s408, 128, 128, 8
        $region44: #{tpu_custom_call.1} parent=27 // pred_fallthru
          _
        // Predicated region
        $region45: #{tpu_custom_call.1} parent=27 // pred_check
          %p451 = pneg %p163
        $region46: #{tpu_custom_call.1} parent=27 // pred_check_branch
          %453 = sbr.rel (%p451) target = $region48
        $region47: #{tpu_custom_call.1} parent=27 // pred_region
          %s455 = ssub.s32 512, 512
          %456 = vsyncadd %s413, %s455
          %s457 = smul.addr %s30, 4
          %s458 = sadd.s32 %s31, %s457
          %s459 = smul.addr %s458, 128
          %s460 = scalar_lea.hbm %s4, %s459
          %s461 = sshll.u32 %s416, 4
          %s462 = int_to_ptr.vmem [resolvable:$true] %s461
          %467 = dma.vmem_to_hbm [thread:$0]  %s462, 512, %s460, %s413, 128, 128, 8
        $region48: #{tpu_custom_call.1} parent=27 // pred_fallthru
          _
      $region28: #{tpu_custom_call.1} parent=5 // pred_fallthru
        _
      %p468 = scmp.le.s32.totalorder 2, %s21
      // Predicated region
      $region49: #{tpu_custom_call.1} parent=5 // pred_check
        %p469 = pneg %p468
      $region50: #{tpu_custom_call.1} parent=5 // pred_check_branch
        %471 = sbr.rel (%p469) target = $region52
      $region51: #{tpu_custom_call.1} parent=5 // pred_region
        %s472 = ssub.s32 %s21, 2
        // Predicated region
        $region53: #{tpu_custom_call.1} parent=51 // pred_check
          %p473 = pneg %p113
        $region54: #{tpu_custom_call.1} parent=51 // pred_check_branch
          %475 = sbr.rel (%p473) target = $region56
        $region55: #{tpu_custom_call.1} parent=51 // pred_region
          %s476 = sand.u32 %s98, 1
          %s477 = scalar_lea.sflag [#allocation4], %s476
          %s478 = sand.u32 %s98, 1
          %s479 = smul.addr %s478, 32
          %s480 = scalar_lea.vmem [#allocation7], %s479
          %481 = dma.done %s477, 512
        $region56: #{tpu_custom_call.1} parent=51 // pred_fallthru
          _
        // Predicated region
        $region57: #{tpu_custom_call.1} parent=51 // pred_check
          %p482 = pneg %p141
        $region58: #{tpu_custom_call.1} parent=51 // pred_check_branch
          %484 = sbr.rel (%p482) target = $region60
        $region59: #{tpu_custom_call.1} parent=51 // pred_region
          %s485 = sand.u32 %s27, 1
          %s486 = scalar_lea.sflag [#allocation9], %s485
          %s487 = sand.u32 %s126, 1
          %s488 = smul.addr %s487, 32
          %s489 = scalar_lea.vmem [#allocation8], %s488
          %490 = dma.done %s486, 512
        $region60: #{tpu_custom_call.1} parent=51 // pred_fallthru
          _
        // Predicated region
        $region61: #{tpu_custom_call.1} parent=51 // pred_check
          %p491 = pneg %p169
        $region62: #{tpu_custom_call.1} parent=51 // pred_check_branch
          %493 = sbr.rel (%p491) target = $region64
        $region63: #{tpu_custom_call.1} parent=51 // pred_region
          %s494 = sand.u32 %s27, 1
          %s495 = scalar_lea.sflag [#allocation9], %s494
          %s496 = sand.u32 %s154, 1
          %s497 = smul.addr %s496, 32
          %s498 = scalar_lea.vmem [#allocation10], %s497
          %499 = dma.done %s495, 512
        $region64: #{tpu_custom_call.1} parent=51 // pred_fallthru
          _
      $region52: #{tpu_custom_call.1} parent=5 // pred_fallthru
        _
    $region6: #{tpu_custom_call.1} parent=1 // loop_footer
      %s25 = sadd.s32 1, %s21
    $region7: #{tpu_custom_call.1} parent=1 // loop_footer_branch
      %20 = sbr.rel target = $region3
    $region8: #{tpu_custom_call.1} parent=1 // loop_exit
      _
    %500 = vsyncpa [#allocation3], 1
    %s501 = scalar_lea.sflag [#allocation3], 1
    %502 = vsyncpa %s501, 1
    %503 = vsyncpa [#allocation6], 1
    %504 = vsyncpa [#allocation4], 1
    %s505 = scalar_lea.sflag [#allocation4], 1
    %506 = vsyncpa %s505, 1
    %507 = vsyncpa [#allocation9], 1
    %s508 = scalar_lea.sflag [#allocation9], 1
    %509 = vsyncpa %s508, 1

</llo_original>
